<compile_context>
chip_gen: v7x
topology: tpu7x:2x2x1
jax: 0.10.0
libtpu: 0.0.40
codegen_flags: <defaults>
</compile_context>

<pallas_src>
import jax
import jax.numpy as jnp
from jax.experimental import pallas as pl
from jax.experimental.pallas import tpu as pltpu


def _largest_divisor_leq(n, cap):
    cap = max(1, min(n, cap))
    for d in range(cap, 0, -1):
        if n % d == 0:
            return d
    return 1


def _make_kernel(ns_red, tk, use_scratch):
    """Sum-over-source-nodes kernel.  Grid = (batch, dst, feat, src[reduction])."""
    needs_mask = (ns_red % tk) != 0

    def _block_sum(msg_ref, k):
        blk = msg_ref[...]                                   # (bb, tm, tk, tf)
        if needs_mask:
            # Ragged reduction tail: contents of the out-of-bounds part of the
            # boundary block are undefined, so mask them to zero (exact for a sum).
            valid = ns_red - k * tk
            iota = jax.lax.broadcasted_iota(jnp.int32, blk.shape, 2)
            blk = jnp.where(iota < valid, blk, jnp.zeros((), blk.dtype))
        # Fuse the f32 upcast into the reduction (no full-tile astype temporary).
        return jnp.sum(blk, axis=2, dtype=jnp.float32)

    if use_scratch:
        # Narrow output dtype: resident f32 accumulator, single cast at the end.
        def kernel(msg_ref, out_ref, acc_ref):
            k = pl.program_id(3)

            @pl.when(k == 0)
            def _():
                acc_ref[...] = jnp.zeros(acc_ref.shape, acc_ref.dtype)

            acc_ref[...] += _block_sum(msg_ref, k)

            @pl.when(k == pl.num_programs(3) - 1)
            def _():
                out_ref[...] = acc_ref[...].astype(out_ref.dtype)

    else:
        # f32 output: the output block is already resident across the reduction
        # axis, so accumulate straight into it (no scratch, no epilogue copy).
        def kernel(msg_ref, out_ref):
            k = pl.program_id(3)

            @pl.when(k == 0)
            def _():
                out_ref[...] = jnp.zeros(out_ref.shape, out_ref.dtype)

            out_ref[...] += _block_sum(msg_ref, k)

    return kernel


def att_msg_agg(messages, adj=None, weight=None, bias=None, *,
                budget_bytes=8 * 1024 * 1024):
    """Forward pass of AttMsgAgg.

    messages: [B, N_dst, N_src, F]; adj: [B, N, N]; weight: (1, 1); bias: (1,).
    adj/weight/bias are accepted for interface fidelity but have no mathematical
    effect (softmax over a size-1 dim == 1.0): out = messages.sum(axis=-2).
    """
    B, Nd, Ns, F = messages.shape
    in_dtype = messages.dtype
    itemsize = jnp.dtype(in_dtype).itemsize

    # ---- Lane-fold small F: pack g source nodes into the 128-lane axis. --------
    # Contiguous reshape [B,Nd,Ns,F] -> [B,Nd,Ns/g,g*F] is metadata-only (no HBM).
    g = 1
    if F < 128 and 128 % F == 0 and Ns > 1:
        g = 128 // F
        while g > 1 and Ns % g != 0:
            g //= 2
    ns_red = Ns // g            # reduction extent seen by the kernel
    fl = F * g                  # lane width seen by the kernel
    msg_k = messages.reshape(B, Nd, ns_red, fl) if g > 1 else messages

    # Kernel output dtype: f32 whenever we accumulate in place / fold afterwards.
    out_dtype = jnp.float32 if (g > 1 or in_dtype == jnp.float32) else in_dtype
    use_scratch = out_dtype != jnp.float32

    # ---- Tile selection (lane-dense; 128 is a multiple of every sublane size). --
    tm = Nd if Nd <= 128 else 128
    tk = ns_red if ns_red <= 128 else 128
    if tm * tk * fl * itemsize <= budget_bytes:
        tf = fl                 # keep the feature axis whole
    else:
        # Huge F: tile F in 128-lane multiples (extra *parallel* axis) rather
        # than shrinking the reduction tile toward the sublane minimum.
        tf = max(128, (budget_bytes // (tm * tk * itemsize)) // 128 * 128)

    nm = pl.cdiv(Nd, tm)
    nf = pl.cdiv(fl, tf)
    nk = pl.cdiv(ns_red, tk)

    # ---- Batch folding: fewer grid steps, but keep >= 2 parallel blocks so both
    # ---- v7x TensorCores get work.
    cap = max(1, budget_bytes // (tm * tk * tf * itemsize))
    bb = _largest_divisor_leq(B, cap)
    if bb > 1 and (B // bb) * nm * nf < 2:
        bb = _largest_divisor_leq(B, bb // 2)
    nb = B // bb

    cost = pl.CostEstimate(
        flops=B * Nd * Ns * F,                         # one add per input element
        transcendentals=0,
        bytes_accessed=(B * Nd * Ns * F) * itemsize
        + (B * Nd * fl) * jnp.dtype(out_dtype).itemsize,
    )

    out_k = pl.pallas_call(
        _make_kernel(ns_red, tk, use_scratch),
        out_shape=jax.ShapeDtypeStruct((B, Nd, fl), out_dtype),
        grid=(nb, nm, nf, nk),
        in_specs=[pl.BlockSpec((bb, tm, tk, tf), lambda b, i, j, k: (b, i, k, j))],
        out_specs=pl.BlockSpec((bb, tm, tf), lambda b, i, j, k: (b, i, j)),
        scratch_shapes=(
            [pltpu.VMEM((bb, tm, tf), jnp.float32)] if use_scratch else []
        ),
        compiler_params=pltpu.CompilerParams(
            # batch / dst / feature tiles are parallel (megacore-shardable);
            # src is the reduction axis with the resident accumulator.
            dimension_semantics=("parallel", "parallel", "parallel", "arbitrary"),
            vmem_limit_bytes=48 * 1024 * 1024,   # fits v7x's 64 MiB physical VMEM
        ),
        cost_estimate=cost,
    )(msg_k)

    if g > 1:
        # Fold the g lane-groups of F back together (tiny op on the small output).
        out_k = out_k.reshape(B, Nd, g, F).sum(axis=2).astype(in_dtype)
    return out_k
    # TODO(synk): a custom attn_act module (instead of the default Softmax) has no
    # generic Pallas equivalent here; only the default (identity-attention) path is
    # implemented.


def _reference(messages, adj, weight, bias):
    # Literal translation of the PyTorch module.
    a = adj[..., None] * weight[0, 0] + bias[0]          # [B, N, N, 1]
    att = jax.nn.softmax(a, axis=-1)                     # softmax over size-1 dim -> 1
    return (messages * att).sum(axis=-2)


if __name__ == "__main__":
    key = jax.random.PRNGKey(0)
    k_msg, k_adj, k_w, k_b = jax.random.split(key, 4)

    # Deterministic nn.Linear(1, 1) params (adj_dim == 1 forced by adj.unsqueeze(-1)).
    weight = jax.random.uniform(k_w, (1, 1), minval=-1.0, maxval=1.0, dtype=jnp.float32)
    bias = jax.random.uniform(k_b, (1,), minval=-1.0, maxval=1.0, dtype=jnp.float32)

    # --- main case: B=2, nodes=8, features=32 (lane-folded g=4 -> 128 lanes) ---
    B, N, F = 2, 8, 32
    messages = jax.random.normal(k_msg, (B, N, N, F), dtype=jnp.float32)
    adj = jax.random.normal(k_adj, (B, N, N), dtype=jnp.float32)

    out = jax.block_until_ready(att_msg_agg(messages, adj, weight, bias))
    ref = _reference(messages, adj, weight, bias)
    assert out.shape == ref.shape == (B, N, F) and out.dtype == messages.dtype
    assert jnp.allclose(out, ref, atol=1e-5, rtol=1e-5), "mismatch (main case)"

    # --- ragged reduction tail: ns_red = 560/4 = 140 -> tk=128 + masked tail of 12 ---
    m2 = jax.random.normal(jax.random.PRNGKey(1), (2, 12, 560, 32), dtype=jnp.float32)
    a2 = jnp.zeros((2, 12, 560), dtype=jnp.float32)
    o2 = jax.block_until_ready(att_msg_agg(m2, a2, weight, bias))
    r2 = _reference(m2, a2, weight, bias)
    assert o2.shape == r2.shape
    assert jnp.allclose(o2, r2, atol=2e-3, rtol=2e-3), "mismatch (masked ragged tail)"

    # --- bf16 input, F >= 128 (no lane fold): f32 scratch accumulator + bf16 store ---
    m3 = jax.random.normal(jax.random.PRNGKey(2), (2, 16, 32, 256), dtype=jnp.bfloat16)
    a3 = jnp.zeros((2, 16, 32), dtype=jnp.float32)
    o3 = jax.block_until_ready(att_msg_agg(m3, a3, weight, bias))
    r3 = _reference(m3, a3, weight, bias)
    assert o3.dtype == jnp.bfloat16
    assert jnp.allclose(o3.astype(jnp.float32), r3, atol=1e-2, rtol=2e-2), \
        "mismatch (bf16 path)"

    print("KERNEL_OK")
</pallas_src>

<mosaic_0001>
module attributes {stable_mosaic.version = 11 : i64} {
  func.func @kernel(%arg0: i32, %arg1: i32, %arg2: i32, %arg3: i32, %arg4: memref<1x8x2x128xf32, #tpu.memory_space<vmem>>, %arg5: memref<1x8x128xf32, #tpu.memory_space<vmem>>) attributes {dimension_semantics = [#tpu.dimension_semantics<parallel>, #tpu.dimension_semantics<parallel>, #tpu.dimension_semantics<parallel>, #tpu.dimension_semantics<arbitrary>], iteration_bounds = array<i64: 2, 1, 1, 1>, scalar_prefetch = 0 : i64, scratch_operands = 0 : i64, tpu.core_type = #tpu.core_type<tc>, window_params = [{transform_indices = @transform_0, window_bounds = array<i64: 1, 8, 2, 128>}, {transform_indices = @transform_1, window_bounds = array<i64: 1, 8, 128>}]} {
    %c0_i32 = arith.constant 0 : i32
    %0 = arith.cmpi eq, %arg3, %c0_i32 : i32
    %1 = arith.extui %0 : i1 to i32
    %c0_i32_0 = arith.constant 0 : i32
    %2 = arith.cmpi ne, %1, %c0_i32_0 : i32
    scf.if %2 {
      %cst_10 = arith.constant 0.000000e+00 : f32
      %8 = vector.broadcast %cst_10 : f32 to vector<1x8x128xf32>
      %c0_11 = arith.constant 0 : index
      %c0_12 = arith.constant 0 : index
      %c0_13 = arith.constant 0 : index
      %9 = vector.load %arg5[%c0_11, %c0_12, %c0_13] : memref<1x8x128xf32, #tpu.memory_space<vmem>>, vector<1x8x128xf32>
      tpu.vector_store %arg5[%c0_11, %c0_12, %c0_13], %8 {strides = array<i32>} : memref<1x8x128xf32, #tpu.memory_space<vmem>>, vector<1x8x128xf32>,
    } else {
    }
    %c0 = arith.constant 0 : index
    %c0_1 = arith.constant 0 : index
    %c0_2 = arith.constant 0 : index
    %3 = vector.load %arg5[%c0, %c0_1, %c0_2] : memref<1x8x128xf32, #tpu.memory_space<vmem>>, vector<1x8x128xf32>
    %c0_3 = arith.constant 0 : index
    %c0_4 = arith.constant 0 : index
    %c0_5 = arith.constant 0 : index
    %c0_6 = arith.constant 0 : index
    %4 = vector.load %arg4[%c0_3, %c0_4, %c0_5, %c0_6] : memref<1x8x2x128xf32, #tpu.memory_space<vmem>>, vector<1x8x2x128xf32>
    %cst = arith.constant dense<0.000000e+00> : vector<1x8x128xf32>
    %5 = vector.multi_reduction <add>, %4, %cst [2] : vector<1x8x2x128xf32> to vector<1x8x128xf32>
    %6 = arith.addf %3, %5 : vector<1x8x128xf32>
    %c0_7 = arith.constant 0 : index
    %c0_8 = arith.constant 0 : index
    %c0_9 = arith.constant 0 : index
    %7 = vector.load %arg5[%c0_7, %c0_8, %c0_9] : memref<1x8x128xf32, #tpu.memory_space<vmem>>, vector<1x8x128xf32>
    tpu.vector_store %arg5[%c0_7, %c0_8, %c0_9], %6 {strides = array<i32>} : memref<1x8x128xf32, #tpu.memory_space<vmem>>, vector<1x8x128xf32>,
    return
  }
  func.func @transform_0(%arg0: i32, %arg1: i32, %arg2: i32, %arg3: i32) -> (i32, i32, i32, i32) {
    %c0_i32 = arith.constant 0 : i32
    return %arg0, %arg1, %arg3, %arg2 : i32, i32, i32, i32
  }
  func.func @transform_1(%arg0: i32, %arg1: i32, %arg2: i32, %arg3: i32) -> (i32, i32, i32) {
    %c0_i32 = arith.constant 0 : i32
    return %arg0, %arg1, %arg2 : i32, i32, i32
  }
}

</mosaic_0001>

<llo_original>
// kernel: tpu_custom_call.1
$region0: #{tpu_custom_call.1}
  #allocation0 [shape = 'u32[]', space=smem, size = 0x4, offset = 0x4, fixed_abs, tag = 'smem constant byte address 0x4 - core index']
  #allocation1 [shape = 'u32[144,128]{1,0:T(1,128)}', space=vmem, size = 0x12000, scoped, tag = 'internal scratch']
  %s0 = inlined_call_operand.hbm [shape: f32[2,8,2,128], index: 0, kind: input, shape index: {}]
  %s1 = inlined_call_operand.hbm [shape: f32[2,8,128], index: 1, kind: output, shape index: {}]
  %s2 = sld [smem:[#allocation0]]
  $region45: #{tpu_custom_call.1} parent=0
    _
  %s4 = ssub.s32 1, %s2
  %s5 = scalar_select 0, %s4, %s2
  $region1: #{tpu_custom_call.1} parent=0
    #allocation2 [shape = 'u8[16384]{0}', space=vmem, size = 0x4000, scoped, tag = 'input window, operand 0']
    #allocation3 [shape = 's32[2]{0}', space=sflag, size = 0x8, scoped, tag = 'scoped memory for tpu_custom_call.1']
    #allocation4 [shape = 's32[2]{0}', space=sflag, size = 0x8, scoped, tag = 'scoped memory for tpu_custom_call.1']
    #allocation5 [shape = 'u8[8192]{0}', space=vmem, size = 0x2000, scoped, tag = 'output window, operand 0']
    %6 = vsyncpa [#allocation3], 0
    %s7 = scalar_lea.sflag [#allocation3], 1
    %8 = vsyncpa %s7, 0
    %9 = vsyncpa [#allocation4], 0
    %s10 = scalar_lea.sflag [#allocation4], 1
    %11 = vsyncpa %s10, 0
    loop: start=0, step=1, limit=4
    $region2: #{tpu_custom_call.1} parent=1 // loop_pre_header
      _
    $region3: #{tpu_custom_call.1} parent=1 // loop_header
      %s13 = sphi 0, %s17
      %p14 = scmp.ge.s32.totalorder %s13, 4
      %s20 = sphi 0, %s46
      %s21 = sphi 0, %s42
      %s22 = sphi 0, %s38
      %s23 = sphi 0, %s34
      %s24 = sphi 0, %s20
      %s25 = sphi 0, %s21
      %s26 = sphi 0, %s22
      %s27 = sphi 0, %s23
      %s28 = sphi 0, %s24
      %s29 = sphi 0, %s25
      %s30 = sphi 0, %s26
      %s31 = sphi 0, %s27
      %s55 = sphi 0, %s57
      %s58 = sphi 0, %s55
      %s59 = sphi 0, %s58
      %s75 = sphi 0, %s59
      %s85 = sphi 0, %s87
      %s88 = sphi 0, %s85
      %s89 = sphi 0, %s88
      %s105 = sphi 0, %s89
    $region4: #{tpu_custom_call.1} parent=1 // loop_header_branch
      %16 = sbr.rel (%p14) target = $region8
    $region5: #{tpu_custom_call.1} parent=1 // loop_body
      %s18 = ssub.s32 %s13, 1
      %s19 = ssub.s32 %s13, 2
      %s32 = sadd.s32 1, %s23
      %p33 = scmp.ge.s32.totalorder %s32, 1
      %s34 = scalar_select %p33, 0, %s32
      %s35 = sadd.s32 1, %s22
      %s36 = scalar_select %p33, %s35, %s22
      %p37 = scmp.ge.s32.totalorder %s36, 1
      %s38 = scalar_select %p37, 0, %s36
      %s39 = sadd.s32 1, %s21
      %s40 = scalar_select %p37, %s39, %s21
      %p41 = scmp.ge.s32.totalorder %s40, 1
      %s42 = scalar_select %p41, 0, %s40
      %s43 = sadd.s32 1, %s20
      %s44 = scalar_select %p41, %s43, %s20
      %p45 = scmp.ge.s32.totalorder %s44, 2
      %s46 = scalar_select %p45, 0, %s44
      %s47 = ssub.s32 %s20, %s46
      %s48 = ssub.s32 %s21, %s42
      %s49 = sor.u32 %s47, %s48
      %s50 = ssub.s32 %s23, %s34
      %s51 = sor.u32 %s49, %s50
      %s52 = ssub.s32 %s22, %s38
      %s53 = sor.u32 %s51, %s52
      %p54 = scmp.eq.s32.totalorder %s53, 0
      %s56 = sadd.s32 %s55, 1
      %s57 = scalar_select %p54, %s55, %s56
      %p60 = pneg %p54
      %p61 = scmp.eq.s32.totalorder %s13, 1
      %p62 = por %p60, %p61
      %p63 = scmp.ne.s32.totalorder %s55, %s58
      %p64 = scmp.eq.s32.totalorder %s13, 0
      %p65 = por %p63, %p64
      %p66 = scmp.ne.s32.totalorder %s55, %s58
      %p67 = scmp.eq.s32.totalorder %s18, 1
      %p68 = por %p66, %p67
      %p69 = scmp.ne.s32.totalorder %s58, %s59
      %p70 = scmp.eq.s32.totalorder %s18, 0
      %p71 = por %p69, %p70
      %p72 = scmp.ne.s32.totalorder %s58, %s59
      %p73 = scmp.eq.s32.totalorder %s19, 1
      %p74 = por %p72, %p73
      %p76 = scmp.ne.s32.totalorder %s59, %s75
      %p77 = scmp.eq.s32.totalorder %s19, 0
      %p78 = por %p76, %p77
      %s79 = ssub.s32 %s20, %s46
      %s80 = ssub.s32 %s21, %s42
      %s81 = sor.u32 %s79, %s80
      %s82 = ssub.s32 %s22, %s38
      %s83 = sor.u32 %s81, %s82
      %p84 = scmp.eq.s32.totalorder %s83, 0
      %s86 = sadd.s32 %s85, 1
      %s87 = scalar_select %p84, %s85, %s86
      %p90 = pneg %p84
      %p91 = scmp.eq.s32.totalorder %s13, 1
      %p92 = por %p90, %p91
      %p93 = scmp.ne.s32.totalorder %s85, %s88
      %p94 = scmp.eq.s32.totalorder %s13, 0
      %p95 = por %p93, %p94
      %p96 = scmp.ne.s32.totalorder %s85, %s88
      %p97 = scmp.eq.s32.totalorder %s18, 1
      %p98 = por %p96, %p97
      %p99 = scmp.ne.s32.totalorder %s88, %s89
      %p100 = scmp.eq.s32.totalorder %s18, 0
      %p101 = por %p99, %p100
      %p102 = scmp.ne.s32.totalorder %s88, %s89
      %p103 = scmp.eq.s32.totalorder %s19, 1
      %p104 = por %p102, %p103
      %p106 = scmp.ne.s32.totalorder %s89, %s105
      %p107 = scmp.eq.s32.totalorder %s19, 0
      %p108 = por %p106, %p107
      %p109 = scmp.le.s32.totalorder 1, %s13
      %p110 = scmp.lt.s32.totalorder %s13, 3
      %p111 = pnand %p109, %p110
      %p112 = pneg %p111
      // Predicated region
      $region9: #{tpu_custom_call.1} parent=5 // pred_check
        _
      $region10: #{tpu_custom_call.1} parent=5 // pred_check_branch
        %114 = sbr.rel (%p111) target = $region12
      $region11: #{tpu_custom_call.1} parent=5 // pred_region
        %s115 = ssub.s32 %s13, 1
      $region12: #{tpu_custom_call.1} parent=5 // pred_fallthru
        _
      %p116 = scmp.lt.s32.totalorder %s13, 2
      // Predicated region
      $region13: #{tpu_custom_call.1} parent=5 // pred_check
        %p117 = pneg %p116
      $region14: #{tpu_custom_call.1} parent=5 // pred_check_branch
        %119 = sbr.rel (%p117) target = $region16
      $region15: #{tpu_custom_call.1} parent=5 // pred_region
        // Predicated region
        $region17: #{tpu_custom_call.1} parent=15 // pred_check
          %p120 = pneg %p65
        $region18: #{tpu_custom_call.1} parent=15 // pred_check_branch
          %122 = sbr.rel (%p120) target = $region20
        $region19: #{tpu_custom_call.1} parent=15 // pred_region
          %s123 = sand.u32 %s55, 1
          %s124 = scalar_lea.sflag [#allocation3], %s123
          %s125 = sand.u32 %s55, 1
          %s126 = smul.addr %s125, 16
          %s127 = scalar_lea.vmem [#allocation2], %s126
          %s128 = smul.u32 8, %s21
          %s130 = ssub.s32 256, 256
          %131 = vsyncadd %s124, %s130
          %s132 = sadd.s32 %s22, %s23
          %s133 = sadd.s32 %s132, %s128
          %s134 = smul.addr %s20, 8
          %s135 = sadd.s32 %s133, %s134
          %s136 = smul.addr %s135, 32
          %s137 = scalar_lea.hbm %s0, %s136
          %s138 = sshll.u32 %s127, 4
          %s139 = int_to_ptr.vmem [resolvable:$true] %s138
          %144 = dma.hbm_to_vmem [thread:$0]  %s137, 256, %s139, %s124, 32, 32, 2
        $region20: #{tpu_custom_call.1} parent=15 // pred_fallthru
          _
      $region16: #{tpu_custom_call.1} parent=5 // pred_fallthru
        _
      %p145 = scmp.le.s32.totalorder 1, %s13
      %p146 = scmp.lt.s32.totalorder %s13, 3
      %p147 = pnand %p145, %p146
      %p148 = pneg %p147
      // Predicated region
      $region21: #{tpu_custom_call.1} parent=5 // pred_check
        _
      $region22: #{tpu_custom_call.1} parent=5 // pred_check_branch
        %150 = sbr.rel (%p147) target = $region24
      $region23: #{tpu_custom_call.1} parent=5 // pred_region
        %s151 = ssub.s32 %s13, 1
        %s152 = sand.u32 %s58, 1
        %s153 = scalar_lea.sflag [#allocation3], %s152
        %s154 = sand.u32 %s58, 1
        %s155 = smul.addr %s154, 16
        %s156 = scalar_lea.vmem [#allocation2], %s155
        // Predicated region
        $region25: #{tpu_custom_call.1} parent=23 // pred_check
          %p157 = pneg %p71
        $region26: #{tpu_custom_call.1} parent=23 // pred_check_branch
          %159 = sbr.rel (%p157) target = $region28
        $region27: #{tpu_custom_call.1} parent=23 // pred_region
          %160 = dma.done %s153, 256
        $region28: #{tpu_custom_call.1} parent=23 // pred_fallthru
          _
        %s161 = sand.u32 %s58, 1
        %s162 = scalar_lea.sflag [#allocation3], %s161
        %s163 = sand.u32 %s58, 1
        %s164 = smul.addr %s163, 16
        %s165 = scalar_lea.vmem [#allocation2], %s164
        %p166 = pneg %p71
        %p167 = pneg %p68
        %p168 = pneg %p101
        %p169 = pneg %p98
        %s170 = sand.u32 %s88, 1
        %s171 = scalar_lea.sflag [#allocation4], %s170
        %s172 = sand.u32 %s88, 1
        %s173 = smul.addr %s172, 8
        %s174 = scalar_lea.vmem [#allocation5], %s173
        %s175 = smul.u32 8, %s25
        %p176 = scmp.eq.s32.totalorder %s27, 0
        // Predicated region
        $region29: #{tpu_custom_call.1} parent=23 // pred_check
          %p177 = pneg %p176
        $region30: #{tpu_custom_call.1} parent=23 // pred_check_branch
          %179 = sbr.rel (%p177) target = $region32
        $region31: #{tpu_custom_call.1} parent=23 // pred_region
          %180 = vst [vmem:[%s174] sm:$0xff] 0.0
        $region32: #{tpu_custom_call.1} parent=23 // pred_fallthru
          _
        %v181 = vld [vmem:[%s174] sm:$0xff]
        %v182 = vld [vmem:[%s156] sm:$0x3]
        %v183 = vld [vmem:[%s156 + $0x2] sm:$0x3]
        %v184 = vld [vmem:[%s156 + $0x4] sm:$0x3]
        %v185 = vld [vmem:[%s156 + $0x6] sm:$0x3]
        %v186 = vld [vmem:[%s156 + $0x8] sm:$0x3]
        %v187 = vld [vmem:[%s156 + $0xa] sm:$0x3]
        %v188 = vld [vmem:[%s156 + $0xc] sm:$0x3]
        %v189 = vld [vmem:[%s156 + $0xe] sm:$0x3]
        %vm190 = vcmask 1041408
        %v191 = vsel %vm190, %v182, 0.0
        %v192 = vrot.slane %v191, 4
        %v193 = vadd.f32 %v191, %v192
        %v194 = vrot.slane %v193, 2
        %v195 = vadd.f32 %v193, %v194
        %v196 = vrot.slane %v195, 1
        %v197 = vadd.f32 %v195, %v196
        %v198 = vsel %vm190, %v183, 0.0
        %v199 = vrot.slane %v198, 4
        %v200 = vadd.f32 %v198, %v199
        %v201 = vrot.slane %v200, 2
        %v202 = vadd.f32 %v200, %v201
        %v203 = vrot.slane %v202, 1
        %v204 = vadd.f32 %v202, %v203
        %v205 = vsel %vm190, %v184, 0.0
        %v206 = vrot.slane %v205, 4
        %v207 = vadd.f32 %v205, %v206
        %v208 = vrot.slane %v207, 2
        %v209 = vadd.f32 %v207, %v208
        %v210 = vrot.slane %v209, 1
        %v211 = vadd.f32 %v209, %v210
        %v212 = vsel %vm190, %v185, 0.0
        %v213 = vrot.slane %v212, 4
        %v214 = vadd.f32 %v212, %v213
        %v215 = vrot.slane %v214, 2
        %v216 = vadd.f32 %v214, %v215
        %v217 = vrot.slane %v216, 1
        %v218 = vadd.f32 %v216, %v217
        %v219 = vsel %vm190, %v186, 0.0
        %v220 = vrot.slane %v219, 4
        %v221 = vadd.f32 %v219, %v220
        %v222 = vrot.slane %v221, 2
        %v223 = vadd.f32 %v221, %v222
        %v224 = vrot.slane %v223, 1
        %v225 = vadd.f32 %v223, %v224
        %v226 = vsel %vm190, %v187, 0.0
        %v227 = vrot.slane %v226, 4
        %v228 = vadd.f32 %v226, %v227
        %v229 = vrot.slane %v228, 2
        %v230 = vadd.f32 %v228, %v229
        %v231 = vrot.slane %v230, 1
        %v232 = vadd.f32 %v230, %v231
        %v233 = vsel %vm190, %v188, 0.0
        %v234 = vrot.slane %v233, 4
        %v235 = vadd.f32 %v233, %v234
        %v236 = vrot.slane %v235, 2
        %v237 = vadd.f32 %v235, %v236
        %v238 = vrot.slane %v237, 1
        %v239 = vadd.f32 %v237, %v238
        %v240 = vsel %vm190, %v189, 0.0
        %v241 = vrot.slane %v240, 4
        %v242 = vadd.f32 %v240, %v241
        %v243 = vrot.slane %v242, 2
        %v244 = vadd.f32 %v242, %v243
        %v245 = vrot.slane %v244, 1
        %v246 = vadd.f32 %v244, %v245
        %vm255 = vcmask 1041409
        %v256 = vsel %vm255, %v204, %v197
        %vm257 = vcmask 1042434
        %v258 = vsel %vm257, %v211, %v256
        %vm259 = vcmask 1043459
        %v260 = vsel %vm259, %v218, %v258
        %vm261 = vcmask 1044484
        %v262 = vsel %vm261, %v225, %v260
        %vm263 = vcmask 1045509
        %v264 = vsel %vm263, %v232, %v262
        %vm265 = vcmask 1046534
        %v266 = vsel %vm265, %v239, %v264
        %vm267 = vcmask 1047559
        %v268 = vsel %vm267, %v246, %v266
        %v270 = vadd.f32 %v181, %v268
        %271 = vst [vmem:[%s174] sm:$0xff] %v270
        %s272 = sand.u32 %s88, 1
        %s273 = scalar_lea.sflag [#allocation4], %s272
        %s274 = sand.u32 %s88, 1
        %s275 = smul.addr %s274, 8
        %s276 = scalar_lea.vmem [#allocation5], %s275
        // Predicated region
        $region33: #{tpu_custom_call.1} parent=23 // pred_check
          %p277 = pneg %p98
        $region34: #{tpu_custom_call.1} parent=23 // pred_check_branch
          %279 = sbr.rel (%p277) target = $region36
        $region35: #{tpu_custom_call.1} parent=23 // pred_region
          %s281 = ssub.s32 128, 128
          %282 = vsyncadd %s273, %s281
          %s283 = sadd.s32 %s26, %s25
          %s284 = sadd.s32 %s283, %s24
          %s285 = smul.addr %s284, 128
          %s286 = scalar_lea.hbm %s1, %s285
          %s288 = sshll.u32 %s276, 4
          %s289 = int_to_ptr.vmem [resolvable:$true] %s288
          %291 = dma.vmem_to_hbm [thread:$0]  %s289, 128, %s286, %s273
        $region36: #{tpu_custom_call.1} parent=23 // pred_fallthru
          _
      $region24: #{tpu_custom_call.1} parent=5 // pred_fallthru
        _
      %p292 = scmp.le.s32.totalorder 2, %s13
      // Predicated region
      $region37: #{tpu_custom_call.1} parent=5 // pred_check
        %p293 = pneg %p292
      $region38: #{tpu_custom_call.1} parent=5 // pred_check_branch
        %295 = sbr.rel (%p293) target = $region40
      $region39: #{tpu_custom_call.1} parent=5 // pred_region
        %s296 = ssub.s32 %s13, 2
        // Predicated region
        $region41: #{tpu_custom_call.1} parent=39 // pred_check
          %p297 = pneg %p104
        $region42: #{tpu_custom_call.1} parent=39 // pred_check_branch
          %299 = sbr.rel (%p297) target = $region44
        $region43: #{tpu_custom_call.1} parent=39 // pred_region
          %s300 = sand.u32 %s89, 1
          %s301 = scalar_lea.sflag [#allocation4], %s300
          %s302 = sand.u32 %s89, 1
          %s303 = smul.addr %s302, 8
          %s304 = scalar_lea.vmem [#allocation5], %s303
          %305 = dma.done %s301, 128
        $region44: #{tpu_custom_call.1} parent=39 // pred_fallthru
          _
      $region40: #{tpu_custom_call.1} parent=5 // pred_fallthru
        _
    $region6: #{tpu_custom_call.1} parent=1 // loop_footer
      %s17 = sadd.s32 1, %s13
    $region7: #{tpu_custom_call.1} parent=1 // loop_footer_branch
      %12 = sbr.rel target = $region3
    $region8: #{tpu_custom_call.1} parent=1 // loop_exit
      _
    %306 = vsyncpa [#allocation3], 1
    %s307 = scalar_lea.sflag [#allocation3], 1
    %308 = vsyncpa %s307, 1
    %309 = vsyncpa [#allocation4], 1
    %s310 = scalar_lea.sflag [#allocation4], 1
    %311 = vsyncpa %s310, 1

</llo_original>
